<compile_context>
chip_gen: v7x
topology: tpu7x:2x2x1
jax: 0.10.0
libtpu: 0.0.40
codegen_flags: <defaults>
</compile_context>

<pallas_src>
import functools
from typing import NamedTuple

import jax
import jax.numpy as jnp
from jax.experimental import pallas as pl
from jax.experimental.pallas import tpu as pltpu

LN_EPS = 1e-5
LANE = 128          # TPU vreg lane width
_MAX_TILE_B = 512   # batch tile for large B (well under any scoped-VMEM limit)


def _round_up(x, m):
    return (x + m - 1) // m * m


def _choose_tile_b(batch):
    # Single grid step for small batches (per-step overhead ~0.35 us), batch
    # tiling + pipelining for large batches.
    if batch <= _MAX_TILE_B:
        return _round_up(max(batch, 1), 8)
    return _MAX_TILE_B


# -----------------------------------------------------------------------------
# Parameters
# -----------------------------------------------------------------------------
class PackedParams(NamedTuple):
    w1: jax.Array   # (D_in, F1P)
    p1: jax.Array   # (3, F1P): [bias, ln_gamma, ln_beta]
    w2: jax.Array   # (F1P, F2P)
    p2: jax.Array   # (3, F2P): [bias, ln_gamma, ln_beta]
    w3: jax.Array   # (F2P, AP)
    b3: jax.Array   # (1, AP)
    fc1_dims: int   # logical widths (LayerNorm reduces over these)
    fc2_dims: int
    n_actions: int


def init_params(key, input_dim, fc1_dims, fc2_dims, n_actions):
    """Deterministic init matching the torch module's __init__ recipe."""
    ks = jax.random.split(key, 6)
    # NOTE: the torch code uses 1/sqrt(weight.size()[0]) == 1/sqrt(out_features);
    # we reproduce that bound exactly.
    f1 = 1.0 / jnp.sqrt(jnp.float32(fc1_dims))
    f2 = 1.0 / jnp.sqrt(jnp.float32(fc2_dims))
    q = 0.003

    # Weights stored [in, out].
    w1 = jax.random.uniform(ks[0], (input_dim, fc1_dims), jnp.float32, -f1, f1)
    b1 = jax.random.uniform(ks[1], (1, fc1_dims), jnp.float32, -f1, f1)
    w2 = jax.random.uniform(ks[2], (fc1_dims, fc2_dims), jnp.float32, -f2, f2)
    b2 = jax.random.uniform(ks[3], (1, fc2_dims), jnp.float32, -f2, f2)
    w3 = jax.random.uniform(ks[4], (fc2_dims, n_actions), jnp.float32, -q, q)
    b3 = jax.random.uniform(ks[5], (1, n_actions), jnp.float32, -q, q)

    # LayerNorm affine params: torch default init (gamma=1, beta=0).
    g1 = jnp.ones((1, fc1_dims), jnp.float32)
    be1 = jnp.zeros((1, fc1_dims), jnp.float32)
    g2 = jnp.ones((1, fc2_dims), jnp.float32)
    be2 = jnp.zeros((1, fc2_dims), jnp.float32)

    return (w1, b1, g1, be1, w2, b2, g2, be2, w3, b3)


def prepare_params(raw, *, weight_dtype=jnp.float32):
    """Pad feature dims to multiples of 128 lanes and pack per-layer vectors.

    Zero-padding invariants relied on by the kernel:
      * padded weight columns/rows are 0  -> padded activation columns are 0
      * padded LN gamma/beta are 0        -> padded columns stay 0 after LN
      * padded mu bias is 0 and tanh(0)=0 -> padded output columns are 0
    """
    (w1, b1, g1, be1, w2, b2, g2, be2, w3, b3) = raw
    fc1 = w1.shape[1]
    fc2 = w2.shape[1]
    n_actions = w3.shape[1]
    f1p = _round_up(fc1, LANE)
    f2p = _round_up(fc2, LANE)
    ap = _round_up(n_actions, LANE)

    def pad_cols(a, n):
        return jnp.pad(a, ((0, 0), (0, n - a.shape[1])))

    def pad_rows(a, n):
        return jnp.pad(a, ((0, n - a.shape[0]), (0, 0)))

    w1p = pad_cols(w1, f1p).astype(weight_dtype)
    w2p = pad_cols(pad_rows(w2, f1p), f2p).astype(weight_dtype)
    w3p = pad_cols(pad_rows(w3, f2p), ap).astype(weight_dtype)

    p1 = jnp.concatenate(
        [pad_cols(b1, f1p), pad_cols(g1, f1p), pad_cols(be1, f1p)], axis=0
    ).astype(jnp.float32)
    p2 = jnp.concatenate(
        [pad_cols(b2, f2p), pad_cols(g2, f2p), pad_cols(be2, f2p)], axis=0
    ).astype(jnp.float32)
    b3p = pad_cols(b3, ap).astype(jnp.float32)

    return PackedParams(w1p, p1, w2p, p2, w3p, b3p, fc1, fc2, n_actions)


# -----------------------------------------------------------------------------
# Kernel
# -----------------------------------------------------------------------------
def _masked_layernorm(h, gamma, beta, n_logical):
    """LayerNorm over the logical (unpadded) width of the last dim.

    Padded columns of `h` are exactly 0 by construction (zero-padded weights
    and biases), so the mean needs no mask; the variance does.
    """
    n_pad = h.shape[-1]
    if n_pad == n_logical:
        mean = jnp.mean(h, axis=-1, keepdims=True)
        var = jnp.mean(jnp.square(h - mean), axis=-1, keepdims=True)
    else:
        inv_n = 1.0 / float(n_logical)
        lane = jax.lax.broadcasted_iota(jnp.int32, (1, n_pad), 1)
        mask = (lane < n_logical).astype(h.dtype)
        mean = jnp.sum(h, axis=-1, keepdims=True) * inv_n  # padded cols are 0
        var = jnp.sum(jnp.square((h - mean) * mask), axis=-1, keepdims=True) * inv_n
    inv = jax.lax.rsqrt(var + LN_EPS)
    # Padded gamma/beta are 0 -> padded columns map back to exactly 0.
    return (h - mean) * inv * gamma + beta


def actor_kernel(
    state_ref,
    w1_ref, p1_ref,
    w2_ref, p2_ref,
    w3_ref, b3_ref,
    out_ref,
    *, fc1_dims, fc2_dims,
):
    w_dtype = w1_ref.dtype  # f32 by default; bf16 if prepared with bf16 weights
    x = state_ref[...]

    # fc1 -> LayerNorm -> relu
    h1 = jnp.dot(x.astype(w_dtype), w1_ref[...], preferred_element_type=jnp.float32)
    h1 = h1 + p1_ref[0:1, :]
    h1 = _masked_layernorm(h1, p1_ref[1:2, :], p1_ref[2:3, :], fc1_dims)
    h1 = jnp.maximum(h1, 0.0)

    # fc2 -> LayerNorm -> relu
    h2 = jnp.dot(h1.astype(w_dtype), w2_ref[...], preferred_element_type=jnp.float32)
    h2 = h2 + p2_ref[0:1, :]
    h2 = _masked_layernorm(h2, p2_ref[1:2, :], p2_ref[2:3, :], fc2_dims)
    h2 = jnp.maximum(h2, 0.0)

    # mu -> tanh  (lane-dense padded output; padded columns come out as tanh(0)=0)
    mu = jnp.dot(h2.astype(w_dtype), w3_ref[...], preferred_element_type=jnp.float32)
    mu = mu + b3_ref[...]
    out_ref[...] = jnp.tanh(mu).astype(out_ref.dtype)


# -----------------------------------------------------------------------------
# Wrapper
# -----------------------------------------------------------------------------
@functools.partial(jax.jit, static_argnames=("fc1_dims", "fc2_dims", "n_actions"))
def _actor_forward_impl(state, w1, p1, w2, p2, w3, b3, *, fc1_dims, fc2_dims, n_actions):
    batch, d_in = state.shape
    tile_b = _choose_tile_b(batch)
    b_pad = _round_up(batch, tile_b)
    if b_pad != batch:
        state = jnp.pad(state, ((0, b_pad - batch), (0, 0)))
    a_pad = w3.shape[1]
    grid = (pl.cdiv(b_pad, tile_b),)

    batch_tiled = lambda i: (i, 0)   # noqa: E731
    resident = lambda i: (0, 0)      # noqa: E731  (weights stay in VMEM across steps)

    kernel = functools.partial(actor_kernel, fc1_dims=fc1_dims, fc2_dims=fc2_dims)

    out_padded = pl.pallas_call(
        kernel,
        out_shape=jax.ShapeDtypeStruct((b_pad, a_pad), jnp.float32),
        grid=grid,
        in_specs=[
            pl.BlockSpec((tile_b, d_in), batch_tiled),
            pl.BlockSpec(w1.shape, resident),
            pl.BlockSpec(p1.shape, resident),
            pl.BlockSpec(w2.shape, resident),
            pl.BlockSpec(p2.shape, resident),
            pl.BlockSpec(w3.shape, resident),
            pl.BlockSpec(b3.shape, resident),
        ],
        out_specs=pl.BlockSpec((tile_b, a_pad), batch_tiled),
        compiler_params=pltpu.CompilerParams(
            dimension_semantics=("parallel",),   # shard batch tiles across TCs (v7x)
            vmem_limit_bytes=32 * 1024 * 1024,   # explicit, fits all of v5e/v6e/v7x
        ),
    )(state, w1, p1, w2, p2, w3, b3)

    return out_padded[:batch, :n_actions]


def actor_forward(state, packed: PackedParams):
    return _actor_forward_impl(
        state,
        packed.w1, packed.p1, packed.w2, packed.p2, packed.w3, packed.b3,
        fc1_dims=packed.fc1_dims,
        fc2_dims=packed.fc2_dims,
        n_actions=packed.n_actions,
    )


# -----------------------------------------------------------------------------
# Pure-JAX reference (uses the raw, unpadded params)
# -----------------------------------------------------------------------------
def _layernorm_ref(x, gamma, beta):
    mean = jnp.mean(x, axis=-1, keepdims=True)
    var = jnp.mean(jnp.square(x - mean), axis=-1, keepdims=True)
    return (x - mean) * jax.lax.rsqrt(var + LN_EPS) * gamma + beta


def actor_forward_ref(state, raw_params):
    (w1, b1, g1, be1, w2, b2, g2, be2, w3, b3) = raw_params
    x = state @ w1 + b1
    x = jnp.maximum(_layernorm_ref(x, g1, be1), 0.0)
    x = x @ w2 + b2
    x = jnp.maximum(_layernorm_ref(x, g2, be2), 0.0)
    return jnp.tanh(x @ w3 + b3)


if __name__ == "__main__":
    # Small shapes consistent with the module: state = [batch, input_dim].
    B, INPUT_DIM, FC1, FC2, N_ACTIONS = 8, 16, 64, 32, 4

    key = jax.random.PRNGKey(0)
    k_state, k_params, k_big = jax.random.split(key, 3)

    raw = init_params(k_params, INPUT_DIM, FC1, FC2, N_ACTIONS)
    packed = prepare_params(raw)  # pass weight_dtype=jnp.bfloat16 for bf16 MXU path

    # Small batch: single grid step.
    state = jax.random.normal(k_state, (B, INPUT_DIM), jnp.float32)
    out = jax.block_until_ready(actor_forward(state, packed))
    ref = actor_forward_ref(state, raw)
    assert out.shape == (B, N_ACTIONS)
    assert jnp.allclose(out, ref, atol=1e-5, rtol=1e-5), "mismatch vs JAX reference (small B)"

    # Larger batch: exercises the batch grid (2 tiles of 512) + padding slice-off.
    B2 = 1000
    state2 = jax.random.normal(k_big, (B2, INPUT_DIM), jnp.float32)
    out2 = jax.block_until_ready(actor_forward(state2, packed))
    ref2 = actor_forward_ref(state2, raw)
    assert out2.shape == (B2, N_ACTIONS)
    assert jnp.allclose(out2, ref2, atol=1e-5, rtol=1e-5), "mismatch vs JAX reference (large B)"

    print("KERNEL_OK")
</pallas_src>

<mosaic_0001>
module attributes {stable_mosaic.version = 11 : i64} {
  func.func @actor_kernel(%arg0: i32, %arg1: memref<8x16xf32, #tpu.memory_space<vmem>>, %arg2: memref<16x128xf32, #tpu.memory_space<vmem>>, %arg3: memref<3x128xf32, #tpu.memory_space<vmem>>, %arg4: memref<128x128xf32, #tpu.memory_space<vmem>>, %arg5: memref<3x128xf32, #tpu.memory_space<vmem>>, %arg6: memref<128x128xf32, #tpu.memory_space<vmem>>, %arg7: memref<1x128xf32, #tpu.memory_space<vmem>>, %arg8: memref<8x128xf32, #tpu.memory_space<vmem>>) attributes {dimension_semantics = [#tpu.dimension_semantics<parallel>], iteration_bounds = array<i64: 1>, scalar_prefetch = 0 : i64, scratch_operands = 0 : i64, tpu.core_type = #tpu.core_type<tc>, window_params = [{transform_indices = @transform_0, window_bounds = array<i64: 8, 16>}, {pipeline_mode = #tpu.pipeline_mode<synchronous>, transform_indices = @transform_1, window_bounds = array<i64: 16, 128>}, {pipeline_mode = #tpu.pipeline_mode<synchronous>, transform_indices = @transform_2, window_bounds = array<i64: 3, 128>}, {pipeline_mode = #tpu.pipeline_mode<synchronous>, transform_indices = @transform_3, window_bounds = array<i64: 128, 128>}, {pipeline_mode = #tpu.pipeline_mode<synchronous>, transform_indices = @transform_4, window_bounds = array<i64: 3, 128>}, {pipeline_mode = #tpu.pipeline_mode<synchronous>, transform_indices = @transform_5, window_bounds = array<i64: 128, 128>}, {pipeline_mode = #tpu.pipeline_mode<synchronous>, transform_indices = @transform_6, window_bounds = array<i64: 1, 128>}, {transform_indices = @transform_7, window_bounds = array<i64: 8, 128>}]} {
    %c0 = arith.constant 0 : index
    %c0_0 = arith.constant 0 : index
    %0 = vector.load %arg1[%c0, %c0_0] : memref<8x16xf32, #tpu.memory_space<vmem>>, vector<8x16xf32>
    %c0_1 = arith.constant 0 : index
    %c0_2 = arith.constant 0 : index
    %1 = vector.load %arg2[%c0_1, %c0_2] : memref<16x128xf32, #tpu.memory_space<vmem>>, vector<16x128xf32>
    %cst = arith.constant dense<0.000000e+00> : vector<8x128xf32>
    %2 = tpu.matmul %0, %1, %cst {dimension_numbers = #tpu.dot_dimension_numbers<[1], [0], [0], [1], [0, 0, 1, 1], [], []>} : vector<8x16xf32>, vector<16x128xf32>, vector<8x128xf32> -> vector<8x128xf32>
    %c0_3 = arith.constant 0 : index
    %c0_4 = arith.constant 0 : index
    %3 = vector.load %arg3[%c0_3, %c0_4] : memref<3x128xf32, #tpu.memory_space<vmem>>, vector<1x128xf32>
    %4 = vector.broadcast %3 : vector<1x128xf32> to vector<8x128xf32>
    %5 = arith.addf %2, %4 : vector<8x128xf32>
    %c1 = arith.constant 1 : index
    %c0_5 = arith.constant 0 : index
    %6 = vector.load %arg3[%c1, %c0_5] : memref<3x128xf32, #tpu.memory_space<vmem>>, vector<1x128xf32>
    %c2 = arith.constant 2 : index
    %c0_6 = arith.constant 0 : index
    %7 = vector.load %arg3[%c2, %c0_6] : memref<3x128xf32, #tpu.memory_space<vmem>>, vector<1x128xf32>
    %8 = tpu.iota {dimensions = array<i32: 1>} : vector<1x128xi32>
    %c64_i32 = arith.constant 64 : i32
    %9 = vector.broadcast %c64_i32 : i32 to vector<1x128xi32>
    %10 = arith.cmpi slt, %8, %9 : vector<1x128xi32>
    %11 = arith.extui %10 : vector<1x128xi1> to vector<1x128xi32>
    %12 = arith.sitofp %11 : vector<1x128xi32> to vector<1x128xf32>
    %cst_7 = arith.constant dense<0.000000e+00> : vector<8xf32>
    %13 = vector.multi_reduction <add>, %5, %cst_7 [1] : vector<8x128xf32> to vector<8xf32>
    %14 = vector.shape_cast %13 : vector<8xf32> to vector<8x1xf32>
    %cst_8 = arith.constant 1.562500e-02 : f32
    %15 = vector.broadcast %cst_8 : f32 to vector<8x1xf32>
    %16 = arith.mulf %14, %15 : vector<8x1xf32>
    %17 = vector.broadcast %16 : vector<8x1xf32> to vector<8x128xf32>
    %18 = arith.subf %5, %17 : vector<8x128xf32>
    %19 = vector.broadcast %12 : vector<1x128xf32> to vector<8x128xf32>
    %20 = arith.mulf %18, %19 : vector<8x128xf32>
    %21 = arith.mulf %20, %20 : vector<8x128xf32>
    %cst_9 = arith.constant dense<0.000000e+00> : vector<8xf32>
    %22 = vector.multi_reduction <add>, %21, %cst_9 [1] : vector<8x128xf32> to vector<8xf32>
    %23 = vector.shape_cast %22 : vector<8xf32> to vector<8x1xf32>
    %cst_10 = arith.constant 1.562500e-02 : f32
    %24 = vector.broadcast %cst_10 : f32 to vector<8x1xf32>
    %25 = arith.mulf %23, %24 : vector<8x1xf32>
    %cst_11 = arith.constant 9.99999974E-6 : f32
    %26 = vector.broadcast %cst_11 : f32 to vector<8x1xf32>
    %27 = arith.addf %25, %26 : vector<8x1xf32>
    %28 = math.rsqrt %27 : vector<8x1xf32>
    %29 = vector.broadcast %16 : vector<8x1xf32> to vector<8x128xf32>
    %30 = arith.subf %5, %29 : vector<8x128xf32>
    %31 = vector.broadcast %28 : vector<8x1xf32> to vector<8x128xf32>
    %32 = arith.mulf %30, %31 : vector<8x128xf32>
    %33 = vector.broadcast %6 : vector<1x128xf32> to vector<8x128xf32>
    %34 = arith.mulf %32, %33 : vector<8x128xf32>
    %35 = vector.broadcast %7 : vector<1x128xf32> to vector<8x128xf32>
    %36 = arith.addf %34, %35 : vector<8x128xf32>
    %cst_12 = arith.constant 0.000000e+00 : f32
    %37 = vector.broadcast %cst_12 : f32 to vector<8x128xf32>
    %38 = arith.maximumf %36, %37 : vector<8x128xf32>
    %c0_13 = arith.constant 0 : index
    %c0_14 = arith.constant 0 : index
    %39 = vector.load %arg4[%c0_13, %c0_14] : memref<128x128xf32, #tpu.memory_space<vmem>>, vector<128x128xf32>
    %cst_15 = arith.constant dense<0.000000e+00> : vector<8x128xf32>
    %40 = tpu.matmul %38, %39, %cst_15 {dimension_numbers = #tpu.dot_dimension_numbers<[1], [0], [0], [1], [0, 0, 1, 1], [], []>} : vector<8x128xf32>, vector<128x128xf32>, vector<8x128xf32> -> vector<8x128xf32>
    %c0_16 = arith.constant 0 : index
    %c0_17 = arith.constant 0 : index
    %41 = vector.load %arg5[%c0_16, %c0_17] : memref<3x128xf32, #tpu.memory_space<vmem>>, vector<1x128xf32>
    %42 = vector.broadcast %41 : vector<1x128xf32> to vector<8x128xf32>
    %43 = arith.addf %40, %42 : vector<8x128xf32>
    %c1_18 = arith.constant 1 : index
    %c0_19 = arith.constant 0 : index
    %44 = vector.load %arg5[%c1_18, %c0_19] : memref<3x128xf32, #tpu.memory_space<vmem>>, vector<1x128xf32>
    %c2_20 = arith.constant 2 : index
    %c0_21 = arith.constant 0 : index
    %45 = vector.load %arg5[%c2_20, %c0_21] : memref<3x128xf32, #tpu.memory_space<vmem>>, vector<1x128xf32>
    %46 = tpu.iota {dimensions = array<i32: 1>} : vector<1x128xi32>
    %c32_i32 = arith.constant 32 : i32
    %47 = vector.broadcast %c32_i32 : i32 to vector<1x128xi32>
    %48 = arith.cmpi slt, %46, %47 : vector<1x128xi32>
    %49 = arith.extui %48 : vector<1x128xi1> to vector<1x128xi32>
    %50 = arith.sitofp %49 : vector<1x128xi32> to vector<1x128xf32>
    %cst_22 = arith.constant dense<0.000000e+00> : vector<8xf32>
    %51 = vector.multi_reduction <add>, %43, %cst_22 [1] : vector<8x128xf32> to vector<8xf32>
    %52 = vector.shape_cast %51 : vector<8xf32> to vector<8x1xf32>
    %cst_23 = arith.constant 3.125000e-02 : f32
    %53 = vector.broadcast %cst_23 : f32 to vector<8x1xf32>
    %54 = arith.mulf %52, %53 : vector<8x1xf32>
    %55 = vector.broadcast %54 : vector<8x1xf32> to vector<8x128xf32>
    %56 = arith.subf %43, %55 : vector<8x128xf32>
    %57 = vector.broadcast %50 : vector<1x128xf32> to vector<8x128xf32>
    %58 = arith.mulf %56, %57 : vector<8x128xf32>
    %59 = arith.mulf %58, %58 : vector<8x128xf32>
    %cst_24 = arith.constant dense<0.000000e+00> : vector<8xf32>
    %60 = vector.multi_reduction <add>, %59, %cst_24 [1] : vector<8x128xf32> to vector<8xf32>
    %61 = vector.shape_cast %60 : vector<8xf32> to vector<8x1xf32>
    %cst_25 = arith.constant 3.125000e-02 : f32
    %62 = vector.broadcast %cst_25 : f32 to vector<8x1xf32>
    %63 = arith.mulf %61, %62 : vector<8x1xf32>
    %cst_26 = arith.constant 9.99999974E-6 : f32
    %64 = vector.broadcast %cst_26 : f32 to vector<8x1xf32>
    %65 = arith.addf %63, %64 : vector<8x1xf32>
    %66 = math.rsqrt %65 : vector<8x1xf32>
    %67 = vector.broadcast %54 : vector<8x1xf32> to vector<8x128xf32>
    %68 = arith.subf %43, %67 : vector<8x128xf32>
    %69 = vector.broadcast %66 : vector<8x1xf32> to vector<8x128xf32>
    %70 = arith.mulf %68, %69 : vector<8x128xf32>
    %71 = vector.broadcast %44 : vector<1x128xf32> to vector<8x128xf32>
    %72 = arith.mulf %70, %71 : vector<8x128xf32>
    %73 = vector.broadcast %45 : vector<1x128xf32> to vector<8x128xf32>
    %74 = arith.addf %72, %73 : vector<8x128xf32>
    %cst_27 = arith.constant 0.000000e+00 : f32
    %75 = vector.broadcast %cst_27 : f32 to vector<8x128xf32>
    %76 = arith.maximumf %74, %75 : vector<8x128xf32>
    %c0_28 = arith.constant 0 : index
    %c0_29 = arith.constant 0 : index
    %77 = vector.load %arg6[%c0_28, %c0_29] : memref<128x128xf32, #tpu.memory_space<vmem>>, vector<128x128xf32>
    %cst_30 = arith.constant dense<0.000000e+00> : vector<8x128xf32>
    %78 = tpu.matmul %76, %77, %cst_30 {dimension_numbers = #tpu.dot_dimension_numbers<[1], [0], [0], [1], [0, 0, 1, 1], [], []>} : vector<8x128xf32>, vector<128x128xf32>, vector<8x128xf32> -> vector<8x128xf32>
    %c0_31 = arith.constant 0 : index
    %c0_32 = arith.constant 0 : index
    %79 = vector.load %arg7[%c0_31, %c0_32] : memref<1x128xf32, #tpu.memory_space<vmem>>, vector<1x128xf32>
    %80 = vector.broadcast %79 : vector<1x128xf32> to vector<8x128xf32>
    %81 = arith.addf %78, %80 : vector<8x128xf32>
    %82 = math.tanh %81 : vector<8x128xf32>
    %c0_33 = arith.constant 0 : index
    %c0_34 = arith.constant 0 : index
    %83 = vector.load %arg8[%c0_33, %c0_34] : memref<8x128xf32, #tpu.memory_space<vmem>>, vector<8x128xf32>
    tpu.vector_store %arg8[%c0_33, %c0_34], %82 {strides = array<i32>} : memref<8x128xf32, #tpu.memory_space<vmem>>, vector<8x128xf32>,
    return
  }
  func.func @transform_0(%arg0: i32) -> (i32, i32) {
    %c0_i32 = arith.constant 0 : i32
    %c0_i32_0 = arith.constant 0 : i32
    return %arg0, %c0_i32 : i32, i32
  }
  func.func @transform_1(%arg0: i32) -> (i32, i32) {
    %c0_i32 = arith.constant 0 : i32
    %c0_i32_0 = arith.constant 0 : i32
    %c0_i32_1 = arith.constant 0 : i32
    return %c0_i32, %c0_i32_0 : i32, i32
  }
  func.func @transform_2(%arg0: i32) -> (i32, i32) {
    %c0_i32 = arith.constant 0 : i32
    %c0_i32_0 = arith.constant 0 : i32
    %c0_i32_1 = arith.constant 0 : i32
    return %c0_i32, %c0_i32_0 : i32, i32
  }
  func.func @transform_3(%arg0: i32) -> (i32, i32) {
    %c0_i32 = arith.constant 0 : i32
    %c0_i32_0 = arith.constant 0 : i32
    %c0_i32_1 = arith.constant 0 : i32
    return %c0_i32, %c0_i32_0 : i32, i32
  }
  func.func @transform_4(%arg0: i32) -> (i32, i32) {
    %c0_i32 = arith.constant 0 : i32
    %c0_i32_0 = arith.constant 0 : i32
    %c0_i32_1 = arith.constant 0 : i32
    return %c0_i32, %c0_i32_0 : i32, i32
  }
  func.func @transform_5(%arg0: i32) -> (i32, i32) {
    %c0_i32 = arith.constant 0 : i32
    %c0_i32_0 = arith.constant 0 : i32
    %c0_i32_1 = arith.constant 0 : i32
    return %c0_i32, %c0_i32_0 : i32, i32
  }
  func.func @transform_6(%arg0: i32) -> (i32, i32) {
    %c0_i32 = arith.constant 0 : i32
    %c0_i32_0 = arith.constant 0 : i32
    %c0_i32_1 = arith.constant 0 : i32
    return %c0_i32, %c0_i32_0 : i32, i32
  }
  func.func @transform_7(%arg0: i32) -> (i32, i32) {
    %c0_i32 = arith.constant 0 : i32
    %c0_i32_0 = arith.constant 0 : i32
    return %arg0, %c0_i32 : i32, i32
  }
}

</mosaic_0001>

<llo_original>
// kernel: _actor_forward_impl.1
$region0: #{_actor_forward_impl.1}
  #allocation0 [shape = 'u32[]', space=smem, size = 0x4, offset = 0x4, fixed_abs, tag = 'smem constant byte address 0x4 - core index']
  #allocation1 [shape = 'u32[144,128]{1,0:T(1,128)}', space=vmem, size = 0x12000, scoped, tag = 'internal scratch']
  %s0 = inlined_call_operand.hbm [shape: f32[8,16], index: 0, kind: input, shape index: {}]
  %s1 = inlined_call_operand.hbm [shape: f32[16,128], index: 1, kind: input, shape index: {}]
  %s2 = inlined_call_operand.vmem [shape: f32[3,128], index: 2, kind: input, shape index: {}]
  %s3 = inlined_call_operand.hbm [shape: f32[128,128], index: 3, kind: input, shape index: {}]
  %s4 = inlined_call_operand.vmem [shape: f32[3,128], index: 4, kind: input, shape index: {}]
  %s5 = inlined_call_operand.hbm [shape: f32[128,128], index: 5, kind: input, shape index: {}]
  %s6 = inlined_call_operand.vmem [shape: f32[1,128], index: 6, kind: input, shape index: {}]
  %s7 = inlined_call_operand.vmem [shape: f32[8,128], index: 7, kind: output, shape index: {}]
  %s8 = sld [smem:[#allocation0]]
  $region54: #{_actor_forward_impl.1} parent=0
    _
  %s10 = ssub.s32 1, %s8
  %s11 = scalar_select 0, %s10, %s8
  $region1: #{_actor_forward_impl.1} parent=0
    #allocation2 [shape = 'u8[4096]{0}', space=vmem, size = 0x1000, scoped, tag = 'input window, operand 0, single buffered']
    #allocation3 [shape = 's32[1]{0}', space=sflag, size = 0x4, scoped, tag = 'scoped memory for _actor_forward_impl.1']
    #allocation4 [shape = 'u8[8192]{0}', space=vmem, size = 0x2000, scoped, tag = 'input window, operand 1, single buffered']
    #allocation5 [shape = 's32[1]{0}', space=sflag, size = 0x4, scoped, tag = 'scoped memory for _actor_forward_impl.1']
    #allocation6 [shape = 'u8[65536]{0}', space=vmem, size = 0x10000, scoped, tag = 'input window, operand 3, single buffered']
    #allocation7 [shape = 'u8[65536]{0}', space=vmem, size = 0x10000, scoped, tag = 'input window, operand 5, single buffered']
    #allocation8 [shape = 's32[1]{0}', space=sflag, size = 0x4, scoped, tag = 'scoped memory for _actor_forward_impl.1']
    %12 = vsyncpa [#allocation3], 0
    %13 = vsyncpa [#allocation5], 0
    %14 = vsyncpa [#allocation8], 0
    // Predicated region
    $region2: #{_actor_forward_impl.1} parent=1 // pred_check
      _
    $region3: #{_actor_forward_impl.1} parent=1 // pred_check_branch
      %16 = sbr.rel (0) target = $region5
    $region4: #{_actor_forward_impl.1} parent=1 // pred_region
      %s18 = ssub.s32 128, 128
      %19 = vsyncadd [#allocation3], %s18
      %s21 = sshll.u32 [#allocation2], 4
      %s22 = int_to_ptr.vmem [resolvable:$true] %s21
      %24 = dma.hbm_to_vmem [thread:$0]  %s0, 128, %s22, [#allocation3]
    $region5: #{_actor_forward_impl.1} parent=1 // pred_fallthru
      _
    // Predicated region
    $region6: #{_actor_forward_impl.1} parent=1 // pred_check
      _
    $region7: #{_actor_forward_impl.1} parent=1 // pred_check_branch
      %26 = sbr.rel (0) target = $region9
    $region8: #{_actor_forward_impl.1} parent=1 // pred_region
      %s28 = ssub.s32 256, 256
      %29 = vsyncadd [#allocation5], %s28
      %s30 = sshll.u32 [#allocation4], 4
      %s31 = int_to_ptr.vmem [resolvable:$true] %s30
      %36 = dma.hbm_to_vmem [thread:$0]  %s1, 256, %s31, [#allocation5], 128, 128, 8
    $region9: #{_actor_forward_impl.1} parent=1 // pred_fallthru
      _
    // Predicated region
    $region10: #{_actor_forward_impl.1} parent=1 // pred_check
      _
    $region11: #{_actor_forward_impl.1} parent=1 // pred_check_branch
      %38 = sbr.rel (0) target = $region13
    $region12: #{_actor_forward_impl.1} parent=1 // pred_region
      _
    $region13: #{_actor_forward_impl.1} parent=1 // pred_fallthru
      _
    // Predicated region
    $region14: #{_actor_forward_impl.1} parent=1 // pred_check
      _
    $region15: #{_actor_forward_impl.1} parent=1 // pred_check_branch
      %40 = sbr.rel (0) target = $region17
    $region16: #{_actor_forward_impl.1} parent=1 // pred_region
      %s42 = ssub.s32 2048, 2048
      %43 = vsyncadd [#allocation5], %s42
      %s44 = sshll.u32 [#allocation6], 4
      %s45 = int_to_ptr.vmem [resolvable:$true] %s44
      %50 = dma.hbm_to_vmem [thread:$0]  %s3, 2048, %s45, [#allocation5], 128, 128, 8
    $region17: #{_actor_forward_impl.1} parent=1 // pred_fallthru
      _
    // Predicated region
    $region18: #{_actor_forward_impl.1} parent=1 // pred_check
      _
    $region19: #{_actor_forward_impl.1} parent=1 // pred_check_branch
      %52 = sbr.rel (0) target = $region21
    $region20: #{_actor_forward_impl.1} parent=1 // pred_region
      _
    $region21: #{_actor_forward_impl.1} parent=1 // pred_fallthru
      _
    // Predicated region
    $region22: #{_actor_forward_impl.1} parent=1 // pred_check
      _
    $region23: #{_actor_forward_impl.1} parent=1 // pred_check_branch
      %54 = sbr.rel (0) target = $region25
    $region24: #{_actor_forward_impl.1} parent=1 // pred_region
      %s56 = ssub.s32 2048, 2048
      %57 = vsyncadd [#allocation8], %s56
      %s58 = sshll.u32 [#allocation7], 4
      %s59 = int_to_ptr.vmem [resolvable:$true] %s58
      %64 = dma.hbm_to_vmem [thread:$0]  %s5, 2048, %s59, [#allocation8], 128, 128, 8
    $region25: #{_actor_forward_impl.1} parent=1 // pred_fallthru
      _
    // Predicated region
    $region26: #{_actor_forward_impl.1} parent=1 // pred_check
      _
    $region27: #{_actor_forward_impl.1} parent=1 // pred_check_branch
      %66 = sbr.rel (0) target = $region29
    $region28: #{_actor_forward_impl.1} parent=1 // pred_region
      _
    $region29: #{_actor_forward_impl.1} parent=1 // pred_fallthru
      _
    // Predicated region
    $region30: #{_actor_forward_impl.1} parent=1 // pred_check
      _
    $region31: #{_actor_forward_impl.1} parent=1 // pred_check_branch
      %68 = sbr.rel (0) target = $region33
    $region32: #{_actor_forward_impl.1} parent=1 // pred_region
      %69 = dma.done [#allocation3], 128
    $region33: #{_actor_forward_impl.1} parent=1 // pred_fallthru
      _
    // Predicated region
    $region34: #{_actor_forward_impl.1} parent=1 // pred_check
      _
    $region35: #{_actor_forward_impl.1} parent=1 // pred_check_branch
      %71 = sbr.rel (0) target = $region37
    $region36: #{_actor_forward_impl.1} parent=1 // pred_region
      %72 = dma.done [#allocation5], 256
    $region37: #{_actor_forward_impl.1} parent=1 // pred_fallthru
      _
    // Predicated region
    $region38: #{_actor_forward_impl.1} parent=1 // pred_check
      _
    $region39: #{_actor_forward_impl.1} parent=1 // pred_check_branch
      %74 = sbr.rel (0) target = $region41
    $region40: #{_actor_forward_impl.1} parent=1 // pred_region
      %75 = dma.done [#allocation5], 2048
    $region41: #{_actor_forward_impl.1} parent=1 // pred_fallthru
      _
    // Predicated region
    $region42: #{_actor_forward_impl.1} parent=1 // pred_check
      _
    $region43: #{_actor_forward_impl.1} parent=1 // pred_check_branch
      %77 = sbr.rel (0) target = $region45
    $region44: #{_actor_forward_impl.1} parent=1 // pred_region
      %78 = dma.done [#allocation8], 2048
    $region45: #{_actor_forward_impl.1} parent=1 // pred_fallthru
      _
    %v79 = vld [vmem:[#allocation2] sm:$0xff]
    %v80 = vld [vmem:[#allocation4] sm:$0xff]
    %v81 = vld [vmem:[#allocation4 + $0x8] sm:$0xff]
    %v82 = vld [vmem:[%s2] sm:$0x1]
    %v83 = vlaneseq
    %v84 = vshrl.u32 %v83, 7
    %v85 = vsub.s32 0, %v84
    %v86 = vrot.slane %v82, %v85
    %vm87 = vcmask 130048
    %v89 = vsel %vm87, %v79, 0
    %91 = vmatprep.subr.mxu0 0.0
    %92 = vmatpush1.msra.mxu0 %v80
    %93 = vmatprep.subr.mxu0 0.0
    %94 = vmatpush1.msra.mxu0 %v81
    %95 = vmatprep.subr.mxu0 0.0
    %96 = vmatpush1.msra.mxu0 0.0
    %97 = vmatprep.subr.mxu0 0.0
    %98 = vmatpush1.msra.mxu0 0.0
    %99 = vmatprep.subr.mxu0 0.0
    %100 = vmatpush1.msra.mxu0 0.0
    %101 = vmatprep.subr.mxu0 0.0
    %102 = vmatpush1.msra.mxu0 0.0
    %103 = vmatprep.subr.mxu0 0.0
    %104 = vmatpush1.msra.mxu0 0.0
    %105 = vmatprep.subr.mxu0 0.0
    %106 = vmatpush1.msra.mxu0 0.0
    %107 = vmatprep.subr.mxu0 0.0
    %108 = vmatpush1.msra.mxu0 0.0
    %109 = vmatprep.subr.mxu0 0.0
    %110 = vmatpush1.msra.mxu0 0.0
    %111 = vmatprep.subr.mxu0 0.0
    %112 = vmatpush1.msra.mxu0 0.0
    %113 = vmatprep.subr.mxu0 0.0
    %114 = vmatpush1.msra.mxu0 0.0
    %115 = vmatprep.subr.mxu0 0.0
    %116 = vmatpush1.msra.mxu0 0.0
    %117 = vmatprep.subr.mxu0 0.0
    %118 = vmatpush1.msra.mxu0 0.0
    %119 = vmatprep.subr.mxu0 0.0
    %120 = vmatpush1.msra.mxu0 0.0
    %121 = vmatprep.subr.mxu0 0.0
    %122 = vmatpush1.msra.mxu0 0.0
    %123 = vmatprep.subr.mxu0 0.0
    %124 = vmatpush1.msra.mxu0 0.0
    %125 = vmatprep.subr.mxu0 0.0
    %126 = vmatpush1.msra.mxu0 0.0
    %127 = vmatprep.subr.mxu0 0.0
    %128 = vmatpush1.msra.mxu0 0.0
    %129 = vmatprep.subr.mxu0 0.0
    %130 = vmatpush1.msra.mxu0 0.0
    %131 = vmatprep.subr.mxu0 0.0
    %132 = vmatpush1.msra.mxu0 0.0
    %133 = vmatprep.subr.mxu0 0.0
    %134 = vmatpush1.msra.mxu0 0.0
    %135 = vmatprep.subr.mxu0 0.0
    %136 = vmatpush1.msra.mxu0 0.0
    %137 = vmatprep.subr.mxu0 0.0
    %138 = vmatpush1.msra.mxu0 0.0
    %139 = vmatprep.subr.mxu0 0.0
    %140 = vmatpush1.msra.mxu0 0.0
    %141 = vmatprep.subr.mxu0 0.0
    %142 = vmatpush1.msra.mxu0 0.0
    %143 = vmatprep.subr.mxu0 0.0
    %144 = vmatpush1.msra.mxu0 0.0
    %145 = vmatprep.subr.mxu0 0.0
    %146 = vmatpush1.msra.mxu0 0.0
    %147 = vmatprep.subr.mxu0 0.0
    %148 = vmatpush1.msra.mxu0 0.0
    %149 = vmatprep.subr.mxu0 0.0
    %150 = vmatpush1.msra.mxu0 0.0
    %151 = vmatprep.subr.mxu0 0.0
    %152 = vmatpush1.msra.mxu0 0.0
    %153 = vmatprep.subr.mxu0 0.0
    %154 = vmatpush1.msra.mxu0 0.0
    %155 = vmatprep.mubr.f32.mxu0 0.0
    %156 = vmatmul.mubr.f32.gmra.mrb[0].mxu0 %v89
    %v157 = vpop.f32.mrb[0].mxu0
    %v158 = vadd.f32 %v86, %v157
    %v159 = vpop.f32.mrb[0].mxu0
    %160 = vdwg.mxu0
    %v161 = vld [vmem:[%s2 + $0x1] sm:$0x1]
    %v162 = vld [vmem:[%s2 + $0x2] sm:$0x1]
    %v163 = vlaneseq
    %v164 = vand.u32 %v163, 127
    %vm165 = vcmp.lt.s32.totalorder %v164, 64
    %v166 = vsel %vm165, 1, 0
    %v167 = vcvt.s32.f32 %v166
    %168 = vadd.xlane.f32.xlu0 %v158
    %v169 = vpop.xlane.xlu0 %168
    %v170 = vmul.f32 %v169, 0.015625
    %v171 = vsub.f32 %v158, %v170
    %v172 = vmul.f32 %v171, %v167
    %v173 = vmul.f32 %v172, %v172
    %174 = vadd.xlane.f32.xlu0 %v173
    %v175 = vpop.xlane.xlu0 %174
    %v176 = vmul.f32 %v175, 0.015625
    %v177 = vadd.f32 %v176, 1e-05
    %v178 = vrsqrt.pop %v177
    %v179 = vmul.f32 %v171, %v178
    %v180 = vlaneseq
    %v181 = vshrl.u32 %v180, 7
    %v182 = vsub.s32 0, %v181
    %v183 = vrot.slane %v161, %v182
    %v184 = vmul.f32 %v179, %v183
    %v185 = vlaneseq
    %v186 = vshrl.u32 %v185, 7
    %v187 = vsub.s32 0, %v186
    %v188 = vrot.slane %v162, %v187
    %v189 = vadd.f32 %v184, %v188
    %v190 = vmax.f32 %v189, 0.0
    %v191 = vld [vmem:[#allocation6] sm:$0xff]
    %v192 = vld [vmem:[#allocation6 + $0x8] sm:$0xff]
    %v193 = vld [vmem:[#allocation6 + $0x10] sm:$0xff]
    %v194 = vld [vmem:[#allocation6 + $0x18] sm:$0xff]
    %v195 = vld [vmem:[#allocation6 + $0x20] sm:$0xff]
    %v196 = vld [vmem:[#allocation6 + $0x28] sm:$0xff]
    %v197 = vld [vmem:[#allocation6 + $0x30] sm:$0xff]
    %v198 = vld [vmem:[#allocation6 + $0x38] sm:$0xff]
    %v199 = vld [vmem:[#allocation6 + $0x40] sm:$0xff]
    %v200 = vld [vmem:[#allocation6 + $0x48] sm:$0xff]
    %v201 = vld [vmem:[#allocation6 + $0x50] sm:$0xff]
    %v202 = vld [vmem:[#allocation6 + $0x58] sm:$0xff]
    %v203 = vld [vmem:[#allocation6 + $0x60] sm:$0xff]
    %v204 = vld [vmem:[#allocation6 + $0x68] sm:$0xff]
    %v205 = vld [vmem:[#allocation6 + $0x70] sm:$0xff]
    %v206 = vld [vmem:[#allocation6 + $0x78] sm:$0xff]
    %v207 = vld [vmem:[%s4] sm:$0x1]
    %v208 = vlaneseq
    %v209 = vshrl.u32 %v208, 7
    %v210 = vsub.s32 0, %v209
    %v211 = vrot.slane %v207, %v210
    %212 = vmatprep.subr.mxu0 0.0
    %213 = vmatpush1.msra.mxu0 %v191
    %214 = vmatprep.subr.mxu0 0.0
    %215 = vmatpush1.msra.mxu0 %v192
    %216 = vmatprep.subr.mxu0 0.0
    %217 = vmatpush1.msra.mxu0 %v193
    %218 = vmatprep.subr.mxu0 0.0
    %219 = vmatpush1.msra.mxu0 %v194
    %220 = vmatprep.subr.mxu0 0.0
    %221 = vmatpush1.msra.mxu0 %v195
    %222 = vmatprep.subr.mxu0 0.0
    %223 = vmatpush1.msra.mxu0 %v196
    %224 = vmatprep.subr.mxu0 0.0
    %225 = vmatpush1.msra.mxu0 %v197
    %226 = vmatprep.subr.mxu0 0.0
    %227 = vmatpush1.msra.mxu0 %v198
    %228 = vmatprep.subr.mxu0 0.0
    %229 = vmatpush1.msra.mxu0 %v199
    %230 = vmatprep.subr.mxu0 0.0
    %231 = vmatpush1.msra.mxu0 %v200
    %232 = vmatprep.subr.mxu0 0.0
    %233 = vmatpush1.msra.mxu0 %v201
    %234 = vmatprep.subr.mxu0 0.0
    %235 = vmatpush1.msra.mxu0 %v202
    %236 = vmatprep.subr.mxu0 0.0
    %237 = vmatpush1.msra.mxu0 %v203
    %238 = vmatprep.subr.mxu0 0.0
    %239 = vmatpush1.msra.mxu0 %v204
    %240 = vmatprep.subr.mxu0 0.0
    %241 = vmatpush1.msra.mxu0 %v205
    %242 = vmatprep.subr.mxu0 0.0
    %243 = vmatpush1.msra.mxu0 %v206
    %244 = vmatprep.subr.mxu0 0.0
    %245 = vmatpush1.msra.mxu0 0.0
    %246 = vmatprep.subr.mxu0 0.0
    %247 = vmatpush1.msra.mxu0 0.0
    %248 = vmatprep.subr.mxu0 0.0
    %249 = vmatpush1.msra.mxu0 0.0
    %250 = vmatprep.subr.mxu0 0.0
    %251 = vmatpush1.msra.mxu0 0.0
    %252 = vmatprep.subr.mxu0 0.0
    %253 = vmatpush1.msra.mxu0 0.0
    %254 = vmatprep.subr.mxu0 0.0
    %255 = vmatpush1.msra.mxu0 0.0
    %256 = vmatprep.subr.mxu0 0.0
    %257 = vmatpush1.msra.mxu0 0.0
    %258 = vmatprep.subr.mxu0 0.0
    %259 = vmatpush1.msra.mxu0 0.0
    %260 = vmatprep.subr.mxu0 0.0
    %261 = vmatpush1.msra.mxu0 0.0
    %262 = vmatprep.subr.mxu0 0.0
    %263 = vmatpush1.msra.mxu0 0.0
    %264 = vmatprep.subr.mxu0 0.0
    %265 = vmatpush1.msra.mxu0 0.0
    %266 = vmatprep.subr.mxu0 0.0
    %267 = vmatpush1.msra.mxu0 0.0
    %268 = vmatprep.subr.mxu0 0.0
    %269 = vmatpush1.msra.mxu0 0.0
    %270 = vmatprep.subr.mxu0 0.0
    %271 = vmatpush1.msra.mxu0 0.0
    %272 = vmatprep.subr.mxu0 0.0
    %273 = vmatpush1.msra.mxu0 0.0
    %274 = vmatprep.subr.mxu0 0.0
    %275 = vmatpush1.msra.mxu0 0.0
    %276 = vmatprep.mubr.f32.mxu0 0.0
    %277 = vmatmul.mubr.f32.gmra.mrb[0].mxu0 %v190
    %v278 = vpop.f32.mrb[0].mxu0
    %v279 = vadd.f32 %v211, %v278
    %v280 = vpop.f32.mrb[0].mxu0
    %281 = vdwg.mxu0
    %v282 = vld [vmem:[%s4 + $0x1] sm:$0x1]
    %v283 = vld [vmem:[%s4 + $0x2] sm:$0x1]
    %vm284 = vcmp.lt.s32.totalorder %v164, 32
    %v285 = vsel %vm284, 1, 0
    %v286 = vcvt.s32.f32 %v285
    %287 = vadd.xlane.f32.xlu0 %v279
    %v288 = vpop.xlane.xlu0 %287
    %v289 = vmul.f32 %v288, 0.03125
    %v290 = vsub.f32 %v279, %v289
    %v291 = vmul.f32 %v290, %v286
    %v292 = vmul.f32 %v291, %v291
    %293 = vadd.xlane.f32.xlu0 %v292
    %v294 = vpop.xlane.xlu0 %293
    %v295 = vmul.f32 %v294, 0.03125
    %v296 = vadd.f32 %v295, 1e-05
    %v297 = vrsqrt.pop %v296
    %v298 = vmul.f32 %v290, %v297
    %v299 = vlaneseq
    %v300 = vshrl.u32 %v299, 7
    %v301 = vsub.s32 0, %v300
    %v302 = vrot.slane %v282, %v301
    %v303 = vmul.f32 %v298, %v302
    %v304 = vlaneseq
    %v305 = vshrl.u32 %v304, 7
    %v306 = vsub.s32 0, %v305
    %v307 = vrot.slane %v283, %v306
    %v308 = vadd.f32 %v303, %v307
    %v309 = vmax.f32 %v308, 0.0
    %v310 = vld [vmem:[#allocation7] sm:$0xff]
    %v311 = vld [vmem:[#allocation7 + $0x8] sm:$0xff]
    %v312 = vld [vmem:[#allocation7 + $0x10] sm:$0xff]
    %v313 = vld [vmem:[#allocation7 + $0x18] sm:$0xff]
    %v314 = vld [vmem:[#allocation7 + $0x20] sm:$0xff]
    %v315 = vld [vmem:[#allocation7 + $0x28] sm:$0xff]
    %v316 = vld [vmem:[#allocation7 + $0x30] sm:$0xff]
    %v317 = vld [vmem:[#allocation7 + $0x38] sm:$0xff]
    %v318 = vld [vmem:[#allocation7 + $0x40] sm:$0xff]
    %v319 = vld [vmem:[#allocation7 + $0x48] sm:$0xff]
    %v320 = vld [vmem:[#allocation7 + $0x50] sm:$0xff]
    %v321 = vld [vmem:[#allocation7 + $0x58] sm:$0xff]
    %v322 = vld [vmem:[#allocation7 + $0x60] sm:$0xff]
    %v323 = vld [vmem:[#allocation7 + $0x68] sm:$0xff]
    %v324 = vld [vmem:[#allocation7 + $0x70] sm:$0xff]
    %v325 = vld [vmem:[#allocation7 + $0x78] sm:$0xff]
    %v326 = vld [vmem:[%s6] sm:$0x1]
    %v328 = vlaneseq
    %v329 = vshrl.u32 %v328, 7
    %v330 = vsub.s32 0, %v329
    %v331 = vrot.slane %v326, %v330
    %333 = vmatprep.subr.mxu0 0.0
    %334 = vmatpush1.msra.mxu0 %v310
    %335 = vmatprep.subr.mxu0 0.0
    %336 = vmatpush1.msra.mxu0 %v311
    %337 = vmatprep.subr.mxu0 0.0
    %338 = vmatpush1.msra.mxu0 %v312
    %339 = vmatprep.subr.mxu0 0.0
    %340 = vmatpush1.msra.mxu0 %v313
    %341 = vmatprep.subr.mxu0 0.0
    %342 = vmatpush1.msra.mxu0 %v314
    %343 = vmatprep.subr.mxu0 0.0
    %344 = vmatpush1.msra.mxu0 %v315
    %345 = vmatprep.subr.mxu0 0.0
    %346 = vmatpush1.msra.mxu0 %v316
    %347 = vmatprep.subr.mxu0 0.0
    %348 = vmatpush1.msra.mxu0 %v317
    %349 = vmatprep.subr.mxu0 0.0
    %350 = vmatpush1.msra.mxu0 %v318
    %351 = vmatprep.subr.mxu0 0.0
    %352 = vmatpush1.msra.mxu0 %v319
    %353 = vmatprep.subr.mxu0 0.0
    %354 = vmatpush1.msra.mxu0 %v320
    %355 = vmatprep.subr.mxu0 0.0
    %356 = vmatpush1.msra.mxu0 %v321
    %357 = vmatprep.subr.mxu0 0.0
    %358 = vmatpush1.msra.mxu0 %v322
    %359 = vmatprep.subr.mxu0 0.0
    %360 = vmatpush1.msra.mxu0 %v323
    %361 = vmatprep.subr.mxu0 0.0
    %362 = vmatpush1.msra.mxu0 %v324
    %363 = vmatprep.subr.mxu0 0.0
    %364 = vmatpush1.msra.mxu0 %v325
    %365 = vmatprep.subr.mxu0 0.0
    %366 = vmatpush1.msra.mxu0 0.0
    %367 = vmatprep.subr.mxu0 0.0
    %368 = vmatpush1.msra.mxu0 0.0
    %369 = vmatprep.subr.mxu0 0.0
    %370 = vmatpush1.msra.mxu0 0.0
    %371 = vmatprep.subr.mxu0 0.0
    %372 = vmatpush1.msra.mxu0 0.0
    %373 = vmatprep.subr.mxu0 0.0
    %374 = vmatpush1.msra.mxu0 0.0
    %375 = vmatprep.subr.mxu0 0.0
    %376 = vmatpush1.msra.mxu0 0.0
    %377 = vmatprep.subr.mxu0 0.0
    %378 = vmatpush1.msra.mxu0 0.0
    %379 = vmatprep.subr.mxu0 0.0
    %380 = vmatpush1.msra.mxu0 0.0
    %381 = vmatprep.subr.mxu0 0.0
    %382 = vmatpush1.msra.mxu0 0.0
    %383 = vmatprep.subr.mxu0 0.0
    %384 = vmatpush1.msra.mxu0 0.0
    %385 = vmatprep.subr.mxu0 0.0
    %386 = vmatpush1.msra.mxu0 0.0
    %387 = vmatprep.subr.mxu0 0.0
    %388 = vmatpush1.msra.mxu0 0.0
    %389 = vmatprep.subr.mxu0 0.0
    %390 = vmatpush1.msra.mxu0 0.0
    %391 = vmatprep.subr.mxu0 0.0
    %392 = vmatpush1.msra.mxu0 0.0
    %393 = vmatprep.subr.mxu0 0.0
    %394 = vmatpush1.msra.mxu0 0.0
    %395 = vmatprep.subr.mxu0 0.0
    %396 = vmatpush1.msra.mxu0 0.0
    %397 = vmatprep.mubr.f32.mxu0 0.0
    %398 = vmatmul.mubr.f32.gmra.mrb[0].mxu0 %v309
    %v399 = vpop.f32.mrb[0].mxu0
    %v400 = vadd.f32 %v331, %v399
    %v401 = vpop.f32.mrb[0].mxu0
    %402 = vdwg.mxu0
    %v403 = vtanh.pop %v400
    %404 = vst [vmem:[%s7] sm:$0xff] %v403
    // Predicated region
    $region46: #{_actor_forward_impl.1} parent=1 // pred_check
      _
    $region47: #{_actor_forward_impl.1} parent=1 // pred_check_branch
      %406 = sbr.rel (0) target = $region49
    $region48: #{_actor_forward_impl.1} parent=1 // pred_region
      _
    $region49: #{_actor_forward_impl.1} parent=1 // pred_fallthru
      _
    // Predicated region
    $region50: #{_actor_forward_impl.1} parent=1 // pred_check
      _
    $region51: #{_actor_forward_impl.1} parent=1 // pred_check_branch
      %408 = sbr.rel (0) target = $region53
    $region52: #{_actor_forward_impl.1} parent=1 // pred_region
      _
    $region53: #{_actor_forward_impl.1} parent=1 // pred_fallthru
      _
    %409 = vsyncpa [#allocation3], 1
    %410 = vsyncpa [#allocation5], 1
    %411 = vsyncpa [#allocation8], 1

</llo_original>
